<compile_context>
chip_gen: v5e
topology: v5e:2x2
jax: 0.10.0
libtpu: 0.0.40
codegen_flags: <defaults>
</compile_context>

<pallas_src>
import jax
import jax.numpy as jnp
from jax.experimental import pallas as pl
from jax.experimental.pallas import tpu as pltpu

IN_DIM = 10
HID_DIM = 50
OUT_DIM = 1
HID_PAD = 128  # hidden dim padded to one full lane width (zeros -> exact result)


def mlp_kernel(x_ref, w1_ref, b1_ref, w2_ref, b2_ref, o_ref):
    # fc1 on the MXU: (TB, 10) @ (10, 128) + (1, 128).
    # Columns 50..127 of w1/b1 are zero, so padded lanes stay exactly 0 after ReLU.
    h = jnp.dot(x_ref[...], w1_ref[...], preferred_element_type=jnp.float32)
    h = jnp.maximum(h + b1_ref[...], 0.0)
    # TODO(synk): F.dropout(p=0.1) is identity in eval mode; training-mode
    # stochastic dropout (pltpu.prng_*) is intentionally omitted.
    # fc2 (out_features=1) as a lane reduction on VPU/XLU; w2 is a zero-padded
    # (1, 128) row, b2 is a scalar read from SMEM.
    y = jnp.sum(h * w2_ref[...], axis=-1, keepdims=True) + b2_ref[0, 0]
    o_ref[...] = y.astype(o_ref.dtype)


def _pad_params(w1, b1, w2, b2):
    """One-time layout plumbing outside the kernel (zero-pad hidden to 128)."""
    w1p = jnp.zeros((IN_DIM, HID_PAD), jnp.float32).at[:, :HID_DIM].set(w1)
    b1p = jnp.zeros((1, HID_PAD), jnp.float32).at[:, :HID_DIM].set(
        jnp.reshape(b1, (1, HID_DIM)))
    w2p = jnp.zeros((1, HID_PAD), jnp.float32).at[:, :HID_DIM].set(
        jnp.reshape(w2, (1, HID_DIM)))
    b2s = jnp.asarray(b2, jnp.float32).reshape(1, 1)
    return w1p, b1p, w2p, b2s


def net_forward(x, w1, b1, w2, b2, *, block_b=512):
    B = x.shape[0]
    w1p, b1p, w2p, b2s = _pad_params(w1, b1, w2, b2)
    smem_spec = pl.BlockSpec(memory_space=pltpu.MemorySpace.SMEM)  # scalar b2

    if B <= block_b:
        # Tiny batch: single block, no grid at all (drops per-step grid
        # bookkeeping for this launch-overhead-bound op).
        return pl.pallas_call(
            mlp_kernel,
            out_shape=jax.ShapeDtypeStruct((B, OUT_DIM), jnp.float32),
            in_specs=[
                pl.BlockSpec((B, IN_DIM), lambda: (0, 0)),
                pl.BlockSpec((IN_DIM, HID_PAD), lambda: (0, 0)),
                pl.BlockSpec((1, HID_PAD), lambda: (0, 0)),
                pl.BlockSpec((1, HID_PAD), lambda: (0, 0)),
                smem_spec,
            ],
            out_specs=pl.BlockSpec((B, OUT_DIM), lambda: (0, 0)),
        )(x, w1p, b1p, w2p, b2s)

    # Large batch: tile the batch axis; "parallel" lets the grid shard across
    # TensorCores (2 TCs on v7x). Weights/biases are broadcast to every block.
    tb = block_b
    return pl.pallas_call(
        mlp_kernel,
        out_shape=jax.ShapeDtypeStruct((B, OUT_DIM), jnp.float32),
        grid=(pl.cdiv(B, tb),),
        in_specs=[
            pl.BlockSpec((tb, IN_DIM), lambda i: (i, 0)),
            pl.BlockSpec((IN_DIM, HID_PAD), lambda i: (0, 0)),
            pl.BlockSpec((1, HID_PAD), lambda i: (0, 0)),
            pl.BlockSpec((1, HID_PAD), lambda i: (0, 0)),
            smem_spec,
        ],
        out_specs=pl.BlockSpec((tb, OUT_DIM), lambda i: (i, 0)),
        compiler_params=pltpu.CompilerParams(
            dimension_semantics=("parallel",),
            # Stay comfortably inside v7x's 64 MiB VMEM even with
            # double-buffered batch tiles (also the v6e scoped default).
            vmem_limit_bytes=32 * 1024 * 1024,
        ),
    )(x, w1p, b1p, w2p, b2s)


def init_params(key):
    # Deterministic init mimicking torch's nn.Linear default:
    # U(-1/sqrt(fan_in), 1/sqrt(fan_in)). Stored in math layout (in, out).
    k1, k2, k3, k4 = jax.random.split(key, 4)
    bound1 = 1.0 / (IN_DIM ** 0.5)
    bound2 = 1.0 / (HID_DIM ** 0.5)
    w1 = jax.random.uniform(k1, (IN_DIM, HID_DIM), jnp.float32, -bound1, bound1)
    b1 = jax.random.uniform(k2, (HID_DIM,), jnp.float32, -bound1, bound1)
    w2 = jax.random.uniform(k3, (HID_DIM, OUT_DIM), jnp.float32, -bound2, bound2)
    b2 = jax.random.uniform(k4, (OUT_DIM,), jnp.float32, -bound2, bound2)
    return w1, b1, w2, b2


if __name__ == "__main__":
    key = jax.random.PRNGKey(0)
    k_x, k_p, k_x2 = jax.random.split(key, 3)

    w1, b1, w2, b2 = init_params(k_p)

    # Small batch -> grid-less single-block path (the Net's nominal use case).
    B_small = 8
    x_small = jax.random.normal(k_x, (B_small, IN_DIM), jnp.float32)
    out_small = net_forward(x_small, w1, b1, w2, b2)
    jax.block_until_ready(out_small)

    # Larger batch -> batch-tiled, megacore-parallel path.
    B_big = 1024
    x_big = jax.random.normal(k_x2, (B_big, IN_DIM), jnp.float32)
    out_big = net_forward(x_big, w1, b1, w2, b2, block_b=256)
    jax.block_until_ready(out_big)

    # Sanity check against plain-JAX reference (eval-mode dropout = identity).
    def ref_fn(x):
        return jnp.maximum(x @ w1 + b1, 0.0) @ w2 + b2

    assert out_small.shape == (B_small, OUT_DIM)
    assert out_big.shape == (B_big, OUT_DIM)
    assert jnp.allclose(out_small, ref_fn(x_small), atol=1e-5, rtol=1e-5)
    assert jnp.allclose(out_big, ref_fn(x_big), atol=1e-5, rtol=1e-5)

    print("KERNEL_OK")
</pallas_src>

<mosaic_0001>
module attributes {stable_mosaic.version = 11 : i64} {
  func.func @mlp_kernel(%arg0: memref<8x10xf32, #tpu.memory_space<vmem>>, %arg1: memref<10x128xf32, #tpu.memory_space<vmem>>, %arg2: memref<1x128xf32, #tpu.memory_space<vmem>>, %arg3: memref<1x128xf32, #tpu.memory_space<vmem>>, %arg4: memref<1x1xf32, #tpu.memory_space<smem>>, %arg5: memref<8x1xf32, #tpu.memory_space<vmem>>) attributes {dimension_semantics = [], scalar_prefetch = 0 : i64, scratch_operands = 0 : i64, tpu.core_type = #tpu.core_type<tc>} {
    %c0 = arith.constant 0 : index
    %c0_0 = arith.constant 0 : index
    %0 = vector.load %arg0[%c0, %c0_0] : memref<8x10xf32, #tpu.memory_space<vmem>>, vector<8x10xf32>
    %c0_1 = arith.constant 0 : index
    %c0_2 = arith.constant 0 : index
    %1 = vector.load %arg1[%c0_1, %c0_2] : memref<10x128xf32, #tpu.memory_space<vmem>>, vector<10x128xf32>
    %cst = arith.constant dense<0.000000e+00> : vector<8x128xf32>
    %2 = tpu.matmul %0, %1, %cst {dimension_numbers = #tpu.dot_dimension_numbers<[1], [0], [0], [1], [0, 0, 1, 1], [], []>} : vector<8x10xf32>, vector<10x128xf32>, vector<8x128xf32> -> vector<8x128xf32>
    %c0_3 = arith.constant 0 : index
    %c0_4 = arith.constant 0 : index
    %3 = vector.load %arg2[%c0_3, %c0_4] : memref<1x128xf32, #tpu.memory_space<vmem>>, vector<1x128xf32>
    %4 = vector.broadcast %3 : vector<1x128xf32> to vector<8x128xf32>
    %5 = arith.addf %2, %4 : vector<8x128xf32>
    %cst_5 = arith.constant 0.000000e+00 : f32
    %6 = vector.broadcast %cst_5 : f32 to vector<8x128xf32>
    %7 = arith.maximumf %5, %6 : vector<8x128xf32>
    %c0_6 = arith.constant 0 : index
    %c0_7 = arith.constant 0 : index
    %8 = vector.load %arg3[%c0_6, %c0_7] : memref<1x128xf32, #tpu.memory_space<vmem>>, vector<1x128xf32>
    %9 = vector.broadcast %8 : vector<1x128xf32> to vector<8x128xf32>
    %10 = arith.mulf %7, %9 : vector<8x128xf32>
    %cst_8 = arith.constant dense<0.000000e+00> : vector<8xf32>
    %11 = vector.multi_reduction <add>, %10, %cst_8 [1] : vector<8x128xf32> to vector<8xf32>
    %12 = vector.shape_cast %11 : vector<8xf32> to vector<8x1xf32>
    %c0_9 = arith.constant 0 : index
    %c0_10 = arith.constant 0 : index
    %13 = memref.load %arg4[%c0_9, %c0_10] : memref<1x1xf32, #tpu.memory_space<smem>>
    %14 = vector.broadcast %13 : f32 to vector<8x1xf32>
    %15 = arith.addf %12, %14 : vector<8x1xf32>
    %c0_11 = arith.constant 0 : index
    %c0_12 = arith.constant 0 : index
    %16 = vector.load %arg5[%c0_11, %c0_12] : memref<8x1xf32, #tpu.memory_space<vmem>>, vector<8x1xf32>
    tpu.vector_store %arg5[%c0_11, %c0_12], %15 {strides = array<i32>} : memref<8x1xf32, #tpu.memory_space<vmem>>, vector<8x1xf32>,
    return
  }
}

</mosaic_0001>

<llo_original>
// kernel: tpu_custom_call.1
$region0: #{tpu_custom_call.1}
  #allocation0 [shape = 'u32[]', space=smem, size = 0x4, offset = 0x4, fixed_abs, tag = 'smem constant byte address 0x4 - core index']
  #allocation1 [shape = 'u32[72,128]{1,0:T(1,128)}', space=vmem, size = 0x9000, scoped, tag = 'internal scratch']
  #allocation2 [shape = 'f32[1,1]{1,0:T(1,128)S(6)}', space=smem, size = 0x200, scoped, tag = 'scoped memory for tpu_custom_call.1']
  %s0 = inlined_call_operand.hbm [shape: f32[8,10], index: 0, kind: input, shape index: {}]
  %s1 = inlined_call_operand.hbm [shape: f32[10,128], index: 1, kind: input, shape index: {}]
  %s2 = inlined_call_operand.vmem [shape: f32[1,128], index: 2, kind: input, shape index: {}]
  %s3 = inlined_call_operand.vmem [shape: f32[1,128], index: 3, kind: input, shape index: {}]
  %s4 = inlined_call_operand.<no memory space> [shape: f32[1,1], index: 4, kind: input, shape index: {}]
  %s5 = inlined_call_operand.vmem [shape: f32[8,1], index: 5, kind: output, shape index: {}]
  %s6 = sld [smem:[#allocation0]]
  $region38: #{tpu_custom_call.1} parent=0
    _
  %s8 = ssub.s32 1, %s6
  %s9 = scalar_select 0, %s8, %s6
  %10 = sst [smem:[#allocation2]] %s4
  $region1: #{tpu_custom_call.1} parent=0
    #allocation3 [shape = 'u8[4096]{0}', space=vmem, size = 0x1000, scoped, tag = 'input window, operand 0, single buffered']
    #allocation4 [shape = 's32[1]{0}', space=sflag, size = 0x4, scoped, tag = 'scoped memory for tpu_custom_call.1']
    #allocation5 [shape = 'u8[8192]{0}', space=vmem, size = 0x2000, scoped, tag = 'input window, operand 1, single buffered']
    #allocation6 [shape = 's32[1]{0}', space=sflag, size = 0x4, scoped, tag = 'scoped memory for tpu_custom_call.1']
    %11 = vsyncpa [#allocation4], 0
    %12 = vsyncpa [#allocation6], 0
    // Predicated region
    $region2: #{tpu_custom_call.1} parent=1 // pred_check
      _
    $region3: #{tpu_custom_call.1} parent=1 // pred_check_branch
      %14 = sbr.rel (0) target = $region5
    $region4: #{tpu_custom_call.1} parent=1 // pred_region
      %16 = vsyncadd [#allocation4], 0
      %s18 = sshll.u32 %s0, 4
      %s19 = int_to_ptr.hbm [resolvable:$true] %s18
      %s20 = sshll.u32 [#allocation3], 4
      %s21 = int_to_ptr.vmem [resolvable:$true] %s20
      %23 = dma.hbm_to_vmem [thread:$0]  %s19, 128, %s21, [#allocation4]
    $region5: #{tpu_custom_call.1} parent=1 // pred_fallthru
      _
    // Predicated region
    $region6: #{tpu_custom_call.1} parent=1 // pred_check
      _
    $region7: #{tpu_custom_call.1} parent=1 // pred_check_branch
      %25 = sbr.rel (0) target = $region9
    $region8: #{tpu_custom_call.1} parent=1 // pred_region
      %27 = vsyncadd [#allocation6], 0
      %s28 = sshll.u32 %s1, 4
      %s29 = int_to_ptr.hbm [resolvable:$true] %s28
      %s30 = sshll.u32 [#allocation5], 4
      %s31 = int_to_ptr.vmem [resolvable:$true] %s30
      %36 = dma.hbm_to_vmem [thread:$0]  %s29, 256, %s31, [#allocation6], 128, 128, 8
    $region9: #{tpu_custom_call.1} parent=1 // pred_fallthru
      _
    // Predicated region
    $region10: #{tpu_custom_call.1} parent=1 // pred_check
      _
    $region11: #{tpu_custom_call.1} parent=1 // pred_check_branch
      %38 = sbr.rel (0) target = $region13
    $region12: #{tpu_custom_call.1} parent=1 // pred_region
      _
    $region13: #{tpu_custom_call.1} parent=1 // pred_fallthru
      _
    // Predicated region
    $region14: #{tpu_custom_call.1} parent=1 // pred_check
      _
    $region15: #{tpu_custom_call.1} parent=1 // pred_check_branch
      %40 = sbr.rel (0) target = $region17
    $region16: #{tpu_custom_call.1} parent=1 // pred_region
      _
    $region17: #{tpu_custom_call.1} parent=1 // pred_fallthru
      _
    // Predicated region
    $region18: #{tpu_custom_call.1} parent=1 // pred_check
      _
    $region19: #{tpu_custom_call.1} parent=1 // pred_check_branch
      %42 = sbr.rel (0) target = $region21
    $region20: #{tpu_custom_call.1} parent=1 // pred_region
      _
    $region21: #{tpu_custom_call.1} parent=1 // pred_fallthru
      _
    // Predicated region
    $region22: #{tpu_custom_call.1} parent=1 // pred_check
      _
    $region23: #{tpu_custom_call.1} parent=1 // pred_check_branch
      %44 = sbr.rel (0) target = $region25
    $region24: #{tpu_custom_call.1} parent=1 // pred_region
      %46 = dma.done [#allocation4], 128
    $region25: #{tpu_custom_call.1} parent=1 // pred_fallthru
      _
    // Predicated region
    $region26: #{tpu_custom_call.1} parent=1 // pred_check
      _
    $region27: #{tpu_custom_call.1} parent=1 // pred_check_branch
      %48 = sbr.rel (0) target = $region29
    $region28: #{tpu_custom_call.1} parent=1 // pred_region
      %50 = dma.done [#allocation6], 256
    $region29: #{tpu_custom_call.1} parent=1 // pred_fallthru
      _
    %v51 = vld [vmem:[#allocation3] sm:$0xff]
    %v52 = vld [vmem:[#allocation5] sm:$0xff]
    %v53 = vld [vmem:[#allocation5 + $0x8] sm:$0x3]
    %v54 = vld [vmem:[%s2] sm:$0x1]
    %v56 = vperm.slane %v54, 0
    %vm58 = vcmask 80896
    %v60 = vsel %vm58, %v51, 0
    %vm62 = vcmask 1041408
    %v64 = vsel %vm62, %v53, 0
    %66 = vmatpush.msra.mxu0 0.0
    %67 = vmatpush.msra.mxu0 0.0
    %68 = vmatpush.msra.mxu0 0.0
    %69 = vmatpush.msra.mxu0 0.0
    %70 = vmatpush.msra.mxu0 0.0
    %71 = vmatpush.msra.mxu0 0.0
    %72 = vmatpush.msra.mxu0 0.0
    %73 = vmatpush.msra.mxu0 0.0
    %74 = vmatpush.msra.mxu0 0.0
    %75 = vmatpush.msra.mxu0 0.0
    %76 = vmatpush.msra.mxu0 0.0
    %77 = vmatpush.msra.mxu0 0.0
    %78 = vmatpush.msra.mxu0 0.0
    %79 = vmatpush.msra.mxu0 0.0
    %80 = vmatpush.msra.mxu0 %v64
    %81 = vmatpush.msra.mxu0 %v52
    %82 = vmatmul.f32.gmra.mxu0 %v60
    %v83 = vpop.f32.mrf.mxu0
    %v84 = vadd.f32 %v56, %v83
    %85 = vdwg.mxu0
    %v86 = vmax.f32 %v84, 0.0
    %v87 = vld [vmem:[%s3] sm:$0x1]
    %v89 = vperm.slane %v87, 0
    %v91 = vmul.f32 %v86, %v89
    %92 = vadd.xlane.f32.xlu0 %v91
    %v93 = vpop.xlane.xlu0 %92
    %s94 = sld [smem:[#allocation2]]
    %v95 = vstv %s94
    %v96 = vadd.f32 %v93, %v95
    %vm97 = vcmask 7168
    %98 = vst.msk [vmem:[%s5] sm:$0xff] %vm97, %v96
    // Predicated region
    $region30: #{tpu_custom_call.1} parent=1 // pred_check
      _
    $region31: #{tpu_custom_call.1} parent=1 // pred_check_branch
      %100 = sbr.rel (0) target = $region33
    $region32: #{tpu_custom_call.1} parent=1 // pred_region
      _
    $region33: #{tpu_custom_call.1} parent=1 // pred_fallthru
      _
    // Predicated region
    $region34: #{tpu_custom_call.1} parent=1 // pred_check
      _
    $region35: #{tpu_custom_call.1} parent=1 // pred_check_branch
      %102 = sbr.rel (0) target = $region37
    $region36: #{tpu_custom_call.1} parent=1 // pred_region
      _
    $region37: #{tpu_custom_call.1} parent=1 // pred_fallthru
      _
    %103 = vsyncpa [#allocation4], 1
    %104 = vsyncpa [#allocation6], 1

</llo_original>
